<compile_context>
chip_gen: v6e
topology: v6e:2x2x1
jax: 0.10.0
libtpu: 0.0.40
codegen_flags: <defaults>
</compile_context>

<pallas_src>
import functools

import jax
import jax.numpy as jnp
from jax.experimental import pallas as pl
from jax.experimental.pallas import tpu as pltpu


def _round_up(x, m):
    return ((x + m - 1) // m) * m


# ----------------------------- Pallas kernel -------------------------------

def cnn_text_kernel(x_ref, w_conv_ref, b_conv_ref, mask_ref,
                    fc_w_ref, fc_b_ref, out_ref):
    """One batch tile per grid step.

    x_ref    : (BB*T_pad, Kmax*E_pad)  bf16   im2col rows for BB batch items
    w_conv_ref: (Kmax*E_pad, COP)      bf16   all filter lengths fused (zero-pad)
    b_conv_ref: (1, COP)               f32    packed conv biases
    mask_ref : (T_pad, COP)            f32    1 where conv position is valid
    fc_w_ref : (COP, C)                f32    fc1 weight * (1 - dropout_mlp)
    fc_b_ref : (1, C)                  f32
    out_ref  : (BB, C)                 f32    clamped softmax probabilities
    """
    T_pad = mask_ref.shape[0]
    rows = x_ref.shape[0]
    BB = rows // T_pad
    COP = w_conv_ref.shape[1]

    # Single fused conv-as-matmul across all filter lengths (MXU, f32 accum).
    scores = jnp.dot(x_ref[...], w_conv_ref[...],
                     preferred_element_type=jnp.float32)        # (BB*T_pad, COP)

    # bias + ReLU, then mask out invalid (past-end / zero-padded) positions.
    scores = jnp.maximum(scores + b_conv_ref[...], 0.0)
    scores = scores.reshape(BB, T_pad, COP) * mask_ref[...][None, :, :]

    # temporal max-pool per (batch, filter, channel)
    feat = jnp.max(scores, axis=1)                              # (BB, COP)

    # fc1 (dropout eval-scale already folded into fc_w in the wrapper)
    logits = jnp.dot(feat, fc_w_ref[...],
                     preferred_element_type=jnp.float32) + fc_b_ref[...]

    # nn.Softmax() on a 2-D tensor -> softmax over dim=1 (classes)
    m = jnp.max(logits, axis=1, keepdims=True)
    e = jnp.exp(logits - m)
    probs = e * pl.reciprocal(jnp.sum(e, axis=1, keepdims=True), approx=True)

    # torch.clamp(logit, min=1e-6, max=1 - 1e-6)
    out_ref[...] = jnp.clip(probs, 1e-6, 1.0 - 1e-6).astype(out_ref.dtype)


# ------------------------------ JAX wrapper ---------------------------------

def cnn_text_forward(token_ids, tag_label_sen_index, params, *, Ks,
                     dropout_mlp, is_training=False):
    """Forward pass of CNN_Text (args.tagsenindexsep=True, eval mode)."""
    del is_training  # only the eval path is implemented (see TODO above)
    Ks = tuple(Ks)

    # --- glue: embedding gathers + concat (plain JAX) ---
    x = params["embed"][token_ids]                                   # (B,L,D)
    x1 = params["embed_tag1"][tag_label_sen_index[0]]                # (B,L,10)
    x2 = params["embed_tag2"][tag_label_sen_index[1]]
    x3 = params["embed_tag3"][tag_label_sen_index[2]]
    x = jnp.concatenate([x, x1, x2, x3], axis=2).astype(jnp.float32)  # (B,L,E)

    B, L, E = x.shape
    Co = params["conv_b0"].shape[-1]
    C = params["fc_w"].shape[1]
    nK = len(Ks)
    K_max, K_min = max(Ks), min(Ks)

    LANE, SUB = 128, 8
    E_pad = _round_up(E, LANE)                  # 80 -> 128 (lane-dense, exact)
    T_pad = _round_up(L - K_min + 1, SUB)       # conv positions, sublane-padded
    COP = _round_up(nK * Co, LANE)              # fused output channels -> 128
    KE = K_max * E_pad
    BB = 8                                      # batch rows per grid step
    B_pad = _round_up(B, BB)
    L_pad = T_pad + K_max - 1

    # zero-pad batch / sequence / feature dims (numerically exact: 0*w = 0)
    x = jnp.pad(x, ((0, B_pad - B), (0, L_pad - L), (0, E_pad - E)))

    # --- im2col / unfold in glue: aligned, lane-dense rows for the kernel ---
    idx = jnp.arange(T_pad)[:, None] + jnp.arange(K_max)[None, :]   # (T_pad,K)
    x_unf = x[:, idx, :]                                 # (B_pad,T_pad,Kmax,E_pad)
    x_unf = x_unf.reshape(B_pad * T_pad, KE).astype(jnp.bfloat16)

    # --- fuse all filter lengths into one weight / bias / validity mask ---
    w_conv = jnp.zeros((K_max, E_pad, COP), jnp.float32)
    b_conv = jnp.zeros((1, COP), jnp.float32)
    mask = jnp.zeros((T_pad, COP), jnp.float32)
    t = jnp.arange(T_pad)
    for i, K in enumerate(Ks):
        w_conv = w_conv.at[:K, :E, i * Co:(i + 1) * Co].set(params[f"conv_w{i}"])
        b_conv = b_conv.at[:, i * Co:(i + 1) * Co].set(params[f"conv_b{i}"])
        valid = (t < (L - K + 1)).astype(jnp.float32)
        mask = mask.at[:, i * Co:(i + 1) * Co].set(
            jnp.broadcast_to(valid[:, None], (T_pad, Co)))
    w_conv = w_conv.reshape(KE, COP).astype(jnp.bfloat16)

    # eval-mode dropout scale folded into fc weight: (f*(1-p)) @ W = f @ (W*(1-p))
    fc_w = jnp.zeros((COP, C), jnp.float32)
    fc_w = fc_w.at[:nK * Co, :].set(params["fc_w"] * (1.0 - dropout_mlp))
    fc_b = params["fc_b"].astype(jnp.float32)                        # (1, C)

    grid = (B_pad // BB,)
    out = pl.pallas_call(
        cnn_text_kernel,
        out_shape=jax.ShapeDtypeStruct((B_pad, C), jnp.float32),
        grid_spec=pltpu.PrefetchScalarGridSpec(
            num_scalar_prefetch=0,
            grid=grid,
            in_specs=[
                pl.BlockSpec((BB * T_pad, KE), lambda i: (i, 0)),   # x tile
                pl.BlockSpec((KE, COP), lambda i: (0, 0)),          # resident
                pl.BlockSpec((1, COP), lambda i: (0, 0)),           # resident
                pl.BlockSpec((T_pad, COP), lambda i: (0, 0)),       # resident
                pl.BlockSpec((COP, C), lambda i: (0, 0)),           # resident
                pl.BlockSpec((1, C), lambda i: (0, 0)),             # resident
            ],
            out_specs=pl.BlockSpec((BB, C), lambda i: (i, 0)),
        ),
        compiler_params=pltpu.CompilerParams(
            dimension_semantics=("parallel",),
            vmem_limit_bytes=32 * 1024 * 1024),
    )(x_unf, w_conv, b_conv, mask, fc_w, fc_b)
    return out[:B]


# --------------------------- pure-JAX reference ------------------------------

def cnn_text_reference(token_ids, tag_label_sen_index, params, *, Ks,
                       dropout_mlp):
    x = params["embed"][token_ids]
    x1 = params["embed_tag1"][tag_label_sen_index[0]]
    x2 = params["embed_tag2"][tag_label_sen_index[1]]
    x3 = params["embed_tag3"][tag_label_sen_index[2]]
    x = jnp.concatenate([x, x1, x2, x3], axis=2).astype(jnp.float32)
    B, L, E = x.shape
    pooled = []
    for i, K in enumerate(Ks):
        w = params[f"conv_w{i}"].reshape(K * E, -1)
        b = params[f"conv_b{i}"][0]
        T = L - K + 1
        s = jnp.stack([x[:, t:t + K, :].reshape(B, -1) @ w for t in range(T)],
                      axis=1)                                     # (B, T, Co)
        s = jax.nn.relu(s + b[None, None, :])
        pooled.append(jnp.max(s, axis=1))
    feat = jnp.concatenate(pooled, axis=1) * (1.0 - dropout_mlp)
    logits = feat @ params["fc_w"] + params["fc_b"][0]
    probs = jax.nn.softmax(logits, axis=1)
    return jnp.clip(probs, 1e-6, 1.0 - 1e-6)


# ------------------------------ parameter init ------------------------------

def init_params(key, *, V, D, tag_dim, Ks, Co, C):
    E = D + 3 * tag_dim
    keys = jax.random.split(key, 6 + len(Ks))
    params = {
        # nn.Embedding default init: N(0, 1)
        "embed": jax.random.normal(keys[0], (V, D), jnp.float32),
        "embed_tag1": jax.random.normal(keys[1], (2, tag_dim), jnp.float32),
        "embed_tag2": jax.random.normal(keys[2], (2, tag_dim), jnp.float32),
        "embed_tag3": jax.random.normal(keys[3], (2, tag_dim), jnp.float32),
        # fc1: weight ~ N(0, 0.01), bias = 0  (stored as (in, C))
        "fc_w": 0.01 * jax.random.normal(keys[4], (len(Ks) * Co, C),
                                         jnp.float32),
        "fc_b": jnp.zeros((1, C), jnp.float32),
    }
    # convs: weight ~ U(0, 0.01), bias = 0  (stored as (K, E, Co))
    for i, K in enumerate(Ks):
        params[f"conv_w{i}"] = jax.random.uniform(
            keys[5 + i], (K, E, Co), jnp.float32, minval=0.0, maxval=0.01)
        params[f"conv_b{i}"] = jnp.zeros((1, Co), jnp.float32)
    return params


# ---------------------------------- main -------------------------------------

if __name__ == "__main__":
    # config / args (synthetic, small)
    V = 100            # args.embed_num
    D = 50             # args.embed_dim
    TAG_DIM = 10       # tag_label_sen_index_embed_size
    Ks = (3, 4, 5)     # config.filter_lengths
    Co = 16            # config.filter_num
    C = 4              # args.class_num
    DROPOUT_MLP = 0.5  # config.dropout_mlp
    B, L = 2, 16       # batch, sequence length

    key = jax.random.PRNGKey(0)
    pkey, tkey, ikey = jax.random.split(key, 3)

    params = init_params(pkey, V=V, D=D, tag_dim=TAG_DIM, Ks=Ks, Co=Co, C=C)

    token_ids = jax.random.randint(ikey, (B, L), 0, V, dtype=jnp.int32)
    tag_label_sen_index = jax.random.randint(tkey, (3, B, L), 0, 2,
                                             dtype=jnp.int32)

    fwd = jax.jit(functools.partial(cnn_text_forward, Ks=Ks,
                                    dropout_mlp=DROPOUT_MLP,
                                    is_training=False))
    out = jax.block_until_ready(fwd(token_ids, tag_label_sen_index, params))

    ref = cnn_text_reference(token_ids, tag_label_sen_index, params,
                             Ks=Ks, dropout_mlp=DROPOUT_MLP)

    assert out.shape == (B, C)
    assert bool(jnp.all(out >= 1e-6)) and bool(jnp.all(out <= 1.0 - 1e-6))
    assert float(jnp.max(jnp.abs(out - ref))) < 1e-2, "mismatch vs JAX reference"
    print("KERNEL_OK")
</pallas_src>

<mosaic_0001>
module attributes {stable_mosaic.version = 11 : i64} {
  func.func @cnn_text_kernel(%arg0: i32, %arg1: memref<128x640xbf16, #tpu.memory_space<vmem>>, %arg2: memref<640x128xbf16, #tpu.memory_space<vmem>>, %arg3: memref<1x128xf32, #tpu.memory_space<vmem>>, %arg4: memref<16x128xf32, #tpu.memory_space<vmem>>, %arg5: memref<128x4xf32, #tpu.memory_space<vmem>>, %arg6: memref<1x4xf32, #tpu.memory_space<vmem>>, %arg7: memref<8x4xf32, #tpu.memory_space<vmem>>) attributes {dimension_semantics = [#tpu.dimension_semantics<parallel>], iteration_bounds = array<i64: 1>, scalar_prefetch = 0 : i64, scratch_operands = 0 : i64, tpu.core_type = #tpu.core_type<tc>, window_params = [{transform_indices = @transform_0, window_bounds = array<i64: 128, 640>}, {pipeline_mode = #tpu.pipeline_mode<synchronous>, transform_indices = @transform_1, window_bounds = array<i64: 640, 128>}, {pipeline_mode = #tpu.pipeline_mode<synchronous>, transform_indices = @transform_2, window_bounds = array<i64: 1, 128>}, {pipeline_mode = #tpu.pipeline_mode<synchronous>, transform_indices = @transform_3, window_bounds = array<i64: 16, 128>}, {pipeline_mode = #tpu.pipeline_mode<synchronous>, transform_indices = @transform_4, window_bounds = array<i64: 128, 4>}, {pipeline_mode = #tpu.pipeline_mode<synchronous>, transform_indices = @transform_5, window_bounds = array<i64: 1, 4>}, {transform_indices = @transform_6, window_bounds = array<i64: 8, 4>}]} {
    %c0 = arith.constant 0 : index
    %c0_0 = arith.constant 0 : index
    %0 = vector.load %arg1[%c0, %c0_0] : memref<128x640xbf16, #tpu.memory_space<vmem>>, vector<128x640xbf16>
    %c0_1 = arith.constant 0 : index
    %c0_2 = arith.constant 0 : index
    %1 = vector.load %arg2[%c0_1, %c0_2] : memref<640x128xbf16, #tpu.memory_space<vmem>>, vector<640x128xbf16>
    %cst = arith.constant dense<0.000000e+00> : vector<128x128xf32>
    %2 = tpu.matmul %0, %1, %cst {dimension_numbers = #tpu.dot_dimension_numbers<[1], [0], [0], [1], [0, 0, 1, 1], [], []>} : vector<128x640xbf16>, vector<640x128xbf16>, vector<128x128xf32> -> vector<128x128xf32>
    %c0_3 = arith.constant 0 : index
    %c0_4 = arith.constant 0 : index
    %3 = vector.load %arg3[%c0_3, %c0_4] : memref<1x128xf32, #tpu.memory_space<vmem>>, vector<1x128xf32>
    %4 = vector.broadcast %3 : vector<1x128xf32> to vector<128x128xf32>
    %5 = arith.addf %2, %4 : vector<128x128xf32>
    %cst_5 = arith.constant 0.000000e+00 : f32
    %6 = vector.broadcast %cst_5 : f32 to vector<128x128xf32>
    %7 = arith.maximumf %5, %6 : vector<128x128xf32>
    %8 = vector.shape_cast %7 : vector<128x128xf32> to vector<8x16x128xf32>
    %c0_6 = arith.constant 0 : index
    %c0_7 = arith.constant 0 : index
    %9 = vector.load %arg4[%c0_6, %c0_7] : memref<16x128xf32, #tpu.memory_space<vmem>>, vector<16x128xf32>
    %10 = vector.shape_cast %9 : vector<16x128xf32> to vector<1x16x128xf32>
    %11 = vector.broadcast %10 : vector<1x16x128xf32> to vector<8x16x128xf32>
    %12 = arith.mulf %8, %11 : vector<8x16x128xf32>
    %cst_8 = arith.constant dense<0xFF800000> : vector<8x128xf32>
    %13 = vector.multi_reduction <maximumf>, %12, %cst_8 [1] : vector<8x16x128xf32> to vector<8x128xf32>
    %c0_9 = arith.constant 0 : index
    %c0_10 = arith.constant 0 : index
    %14 = vector.load %arg5[%c0_9, %c0_10] : memref<128x4xf32, #tpu.memory_space<vmem>>, vector<128x4xf32>
    %cst_11 = arith.constant dense<0.000000e+00> : vector<8x4xf32>
    %15 = tpu.matmul %13, %14, %cst_11 {dimension_numbers = #tpu.dot_dimension_numbers<[1], [0], [0], [1], [0, 0, 1, 1], [], []>} : vector<8x128xf32>, vector<128x4xf32>, vector<8x4xf32> -> vector<8x4xf32>
    %c0_12 = arith.constant 0 : index
    %c0_13 = arith.constant 0 : index
    %16 = vector.load %arg6[%c0_12, %c0_13] : memref<1x4xf32, #tpu.memory_space<vmem>>, vector<1x4xf32>
    %17 = vector.broadcast %16 : vector<1x4xf32> to vector<8x4xf32>
    %18 = arith.addf %15, %17 : vector<8x4xf32>
    %cst_14 = arith.constant dense<0xFF800000> : vector<8xf32>
    %19 = vector.multi_reduction <maximumf>, %18, %cst_14 [1] : vector<8x4xf32> to vector<8xf32>
    %20 = vector.shape_cast %19 : vector<8xf32> to vector<8x1xf32>
    %21 = vector.broadcast %20 : vector<8x1xf32> to vector<8x4xf32>
    %22 = arith.subf %18, %21 : vector<8x4xf32>
    %23 = math.exp %22 : vector<8x4xf32>
    %cst_15 = arith.constant dense<0.000000e+00> : vector<8xf32>
    %24 = vector.multi_reduction <add>, %23, %cst_15 [1] : vector<8x4xf32> to vector<8xf32>
    %25 = vector.shape_cast %24 : vector<8xf32> to vector<8x1xf32>
    %26 = tpu.reciprocal %25 {approx = true} : vector<8x1xf32> -> vector<8x1xf32>
    %27 = vector.broadcast %26 : vector<8x1xf32> to vector<8x4xf32>
    %28 = arith.mulf %23, %27 : vector<8x4xf32>
    %cst_16 = arith.constant 9.99999997E-7 : f32
    %cst_17 = arith.constant 0.999998986 : f32
    %29 = vector.broadcast %cst_16 : f32 to vector<8x4xf32>
    %30 = arith.maximumf %29, %28 : vector<8x4xf32>
    %31 = vector.broadcast %cst_17 : f32 to vector<8x4xf32>
    %32 = arith.minimumf %31, %30 : vector<8x4xf32>
    %c0_18 = arith.constant 0 : index
    %c0_19 = arith.constant 0 : index
    %33 = vector.load %arg7[%c0_18, %c0_19] : memref<8x4xf32, #tpu.memory_space<vmem>>, vector<8x4xf32>
    tpu.vector_store %arg7[%c0_18, %c0_19], %32 {strides = array<i32>} : memref<8x4xf32, #tpu.memory_space<vmem>>, vector<8x4xf32>,
    return
  }
  func.func @transform_0(%arg0: i32) -> (i32, i32) {
    %c0_i32 = arith.constant 0 : i32
    %c0_i32_0 = arith.constant 0 : i32
    return %arg0, %c0_i32 : i32, i32
  }
  func.func @transform_1(%arg0: i32) -> (i32, i32) {
    %c0_i32 = arith.constant 0 : i32
    %c0_i32_0 = arith.constant 0 : i32
    %c0_i32_1 = arith.constant 0 : i32
    return %c0_i32, %c0_i32_0 : i32, i32
  }
  func.func @transform_2(%arg0: i32) -> (i32, i32) {
    %c0_i32 = arith.constant 0 : i32
    %c0_i32_0 = arith.constant 0 : i32
    %c0_i32_1 = arith.constant 0 : i32
    return %c0_i32, %c0_i32_0 : i32, i32
  }
  func.func @transform_3(%arg0: i32) -> (i32, i32) {
    %c0_i32 = arith.constant 0 : i32
    %c0_i32_0 = arith.constant 0 : i32
    %c0_i32_1 = arith.constant 0 : i32
    return %c0_i32, %c0_i32_0 : i32, i32
  }
  func.func @transform_4(%arg0: i32) -> (i32, i32) {
    %c0_i32 = arith.constant 0 : i32
    %c0_i32_0 = arith.constant 0 : i32
    %c0_i32_1 = arith.constant 0 : i32
    return %c0_i32, %c0_i32_0 : i32, i32
  }
  func.func @transform_5(%arg0: i32) -> (i32, i32) {
    %c0_i32 = arith.constant 0 : i32
    %c0_i32_0 = arith.constant 0 : i32
    %c0_i32_1 = arith.constant 0 : i32
    return %c0_i32, %c0_i32_0 : i32, i32
  }
  func.func @transform_6(%arg0: i32) -> (i32, i32) {
    %c0_i32 = arith.constant 0 : i32
    %c0_i32_0 = arith.constant 0 : i32
    return %arg0, %c0_i32 : i32, i32
  }
}

</mosaic_0001>

<llo_original>
// kernel: cnn_text_forward.1
$region0: #{cnn_text_forward.1}
  #allocation0 [shape = 'u32[]', space=smem, size = 0x4, offset = 0x4, fixed_abs, tag = 'smem constant byte address 0x4 - core index']
  #allocation1 [shape = 'u32[144,128]{1,0:T(1,128)}', space=vmem, size = 0x12000, scoped, tag = 'internal scratch']
  %s0 = inlined_call_operand.vmem [shape: bf16[128,640], index: 0, kind: input, shape index: {}]
  %s1 = inlined_call_operand.vmem [shape: bf16[640,128], index: 1, kind: input, shape index: {}]
  %s2 = inlined_call_operand.vmem [shape: f32[1,128], index: 2, kind: input, shape index: {}]
  %s3 = inlined_call_operand.vmem [shape: f32[16,128], index: 3, kind: input, shape index: {}]
  %s4 = inlined_call_operand.vmem [shape: f32[128,4], index: 4, kind: input, shape index: {}]
  %s5 = inlined_call_operand.vmem [shape: f32[1,4], index: 5, kind: input, shape index: {}]
  %s6 = inlined_call_operand.vmem [shape: f32[8,4], index: 6, kind: output, shape index: {}]
  %s7 = sld [smem:[#allocation0]]
  $region34: #{cnn_text_forward.1} parent=0
    _
  %s9 = ssub.s32 1, %s7
  %s10 = scalar_select 0, %s9, %s7
  // Predicated region
  $region2: #{cnn_text_forward.1} parent=0 // pred_check
    _
  $region3: #{cnn_text_forward.1} parent=0 // pred_check_branch
    %12 = sbr.rel (0) target = $region5
  $region4: #{cnn_text_forward.1} parent=0 // pred_region
    _
  $region5: #{cnn_text_forward.1} parent=0 // pred_fallthru
    _
  // Predicated region
  $region6: #{cnn_text_forward.1} parent=0 // pred_check
    _
  $region7: #{cnn_text_forward.1} parent=0 // pred_check_branch
    %14 = sbr.rel (0) target = $region9
  $region8: #{cnn_text_forward.1} parent=0 // pred_region
    _
  $region9: #{cnn_text_forward.1} parent=0 // pred_fallthru
    _
  // Predicated region
  $region10: #{cnn_text_forward.1} parent=0 // pred_check
    _
  $region11: #{cnn_text_forward.1} parent=0 // pred_check_branch
    %16 = sbr.rel (0) target = $region13
  $region12: #{cnn_text_forward.1} parent=0 // pred_region
    _
  $region13: #{cnn_text_forward.1} parent=0 // pred_fallthru
    _
  // Predicated region
  $region14: #{cnn_text_forward.1} parent=0 // pred_check
    _
  $region15: #{cnn_text_forward.1} parent=0 // pred_check_branch
    %18 = sbr.rel (0) target = $region17
  $region16: #{cnn_text_forward.1} parent=0 // pred_region
    _
  $region17: #{cnn_text_forward.1} parent=0 // pred_fallthru
    _
  // Predicated region
  $region18: #{cnn_text_forward.1} parent=0 // pred_check
    _
  $region19: #{cnn_text_forward.1} parent=0 // pred_check_branch
    %20 = sbr.rel (0) target = $region21
  $region20: #{cnn_text_forward.1} parent=0 // pred_region
    _
  $region21: #{cnn_text_forward.1} parent=0 // pred_fallthru
    _
  // Predicated region
  $region22: #{cnn_text_forward.1} parent=0 // pred_check
    _
  $region23: #{cnn_text_forward.1} parent=0 // pred_check_branch
    %22 = sbr.rel (0) target = $region25
  $region24: #{cnn_text_forward.1} parent=0 // pred_region
    _
  $region25: #{cnn_text_forward.1} parent=0 // pred_fallthru
    _
  %v24 = vld [vmem:[%s0] sm:$0xff]
  %v25 = vld [vmem:[%s0 + $0x8] sm:$0xff]
  %v26 = vld [vmem:[%s0 + $0x10] sm:$0xf]
  %v27 = vld [vmem:[%s0 + $0x14] sm:$0xff]
  %v28 = vld [vmem:[%s0 + $0x1c] sm:$0xff]
  %v29 = vld [vmem:[%s0 + $0x24] sm:$0xf]
  %v30 = vld [vmem:[%s0 + $0x28] sm:$0xff]
  %v31 = vld [vmem:[%s0 + $0x30] sm:$0xff]
  %v32 = vld [vmem:[%s0 + $0x38] sm:$0xf]
  %v33 = vld [vmem:[%s0 + $0x3c] sm:$0xff]
  %v34 = vld [vmem:[%s0 + $0x44] sm:$0xff]
  %v35 = vld [vmem:[%s0 + $0x4c] sm:$0xf]
  %v36 = vld [vmem:[%s0 + $0x50] sm:$0xff]
  %v37 = vld [vmem:[%s0 + $0x58] sm:$0xff]
  %v38 = vld [vmem:[%s0 + $0x60] sm:$0xf]
  %v39 = vld [vmem:[%s0 + $0x64] sm:$0xff]
  %v40 = vld [vmem:[%s0 + $0x6c] sm:$0xff]
  %v41 = vld [vmem:[%s0 + $0x74] sm:$0xf]
  %v42 = vld [vmem:[%s0 + $0x78] sm:$0xff]
  %v43 = vld [vmem:[%s0 + $0x80] sm:$0xff]
  %v44 = vld [vmem:[%s0 + $0x88] sm:$0xf]
  %v45 = vld [vmem:[%s0 + $0x8c] sm:$0xff]
  %v46 = vld [vmem:[%s0 + $0x94] sm:$0xff]
  %v47 = vld [vmem:[%s0 + $0x9c] sm:$0xf]
  %v48 = vld [vmem:[%s0 + $0xa0] sm:$0xff]
  %v49 = vld [vmem:[%s0 + $0xa8] sm:$0xff]
  %v50 = vld [vmem:[%s0 + $0xb0] sm:$0xf]
  %v51 = vld [vmem:[%s0 + $0xb4] sm:$0xff]
  %v52 = vld [vmem:[%s0 + $0xbc] sm:$0xff]
  %v53 = vld [vmem:[%s0 + $0xc4] sm:$0xf]
  %v54 = vld [vmem:[%s0 + $0xc8] sm:$0xff]
  %v55 = vld [vmem:[%s0 + $0xd0] sm:$0xff]
  %v56 = vld [vmem:[%s0 + $0xd8] sm:$0xf]
  %v57 = vld [vmem:[%s0 + $0xdc] sm:$0xff]
  %v58 = vld [vmem:[%s0 + $0xe4] sm:$0xff]
  %v59 = vld [vmem:[%s0 + $0xec] sm:$0xf]
  %v60 = vld [vmem:[%s0 + $0xf0] sm:$0xff]
  %v61 = vld [vmem:[%s0 + $0xf8] sm:$0xff]
  %v62 = vld [vmem:[%s0 + $0x100] sm:$0xf]
  %v63 = vld [vmem:[%s0 + $0x104] sm:$0xff]
  %v64 = vld [vmem:[%s0 + $0x10c] sm:$0xff]
  %v65 = vld [vmem:[%s0 + $0x114] sm:$0xf]
  %v66 = vld [vmem:[%s0 + $0x118] sm:$0xff]
  %v67 = vld [vmem:[%s0 + $0x120] sm:$0xff]
  %v68 = vld [vmem:[%s0 + $0x128] sm:$0xf]
  %v69 = vld [vmem:[%s0 + $0x12c] sm:$0xff]
  %v70 = vld [vmem:[%s0 + $0x134] sm:$0xff]
  %v71 = vld [vmem:[%s0 + $0x13c] sm:$0xf]
  %v72 = vld [vmem:[%s1] sm:$0xf]
  %v73 = vld [vmem:[%s1 + $0x4] sm:$0xf]
  %v74 = vld [vmem:[%s1 + $0x8] sm:$0xf]
  %v75 = vld [vmem:[%s1 + $0xc] sm:$0xf]
  %v76 = vld [vmem:[%s1 + $0x10] sm:$0xf]
  %v77 = vld [vmem:[%s1 + $0x14] sm:$0xf]
  %v78 = vld [vmem:[%s1 + $0x18] sm:$0xf]
  %v79 = vld [vmem:[%s1 + $0x1c] sm:$0xf]
  %v80 = vld [vmem:[%s1 + $0x20] sm:$0xf]
  %v81 = vld [vmem:[%s1 + $0x24] sm:$0xf]
  %v82 = vld [vmem:[%s1 + $0x28] sm:$0xf]
  %v83 = vld [vmem:[%s1 + $0x2c] sm:$0xf]
  %v84 = vld [vmem:[%s1 + $0x30] sm:$0xf]
  %v85 = vld [vmem:[%s1 + $0x34] sm:$0xf]
  %v86 = vld [vmem:[%s1 + $0x38] sm:$0xf]
  %v87 = vld [vmem:[%s1 + $0x3c] sm:$0xf]
  %v88 = vld [vmem:[%s1 + $0x40] sm:$0xf]
  %v89 = vld [vmem:[%s1 + $0x44] sm:$0xf]
  %v90 = vld [vmem:[%s1 + $0x48] sm:$0xf]
  %v91 = vld [vmem:[%s1 + $0x4c] sm:$0xf]
  %v92 = vld [vmem:[%s1 + $0x50] sm:$0xf]
  %v93 = vld [vmem:[%s1 + $0x54] sm:$0xf]
  %v94 = vld [vmem:[%s1 + $0x58] sm:$0xf]
  %v95 = vld [vmem:[%s1 + $0x5c] sm:$0xf]
  %v96 = vld [vmem:[%s1 + $0x60] sm:$0xf]
  %v97 = vld [vmem:[%s1 + $0x64] sm:$0xf]
  %v98 = vld [vmem:[%s1 + $0x68] sm:$0xf]
  %v99 = vld [vmem:[%s1 + $0x6c] sm:$0xf]
  %v100 = vld [vmem:[%s1 + $0x70] sm:$0xf]
  %v101 = vld [vmem:[%s1 + $0x74] sm:$0xf]
  %v102 = vld [vmem:[%s1 + $0x78] sm:$0xf]
  %v103 = vld [vmem:[%s1 + $0x7c] sm:$0xf]
  %v104 = vld [vmem:[%s1 + $0x80] sm:$0xf]
  %v105 = vld [vmem:[%s1 + $0x84] sm:$0xf]
  %v106 = vld [vmem:[%s1 + $0x88] sm:$0xf]
  %v107 = vld [vmem:[%s1 + $0x8c] sm:$0xf]
  %v108 = vld [vmem:[%s1 + $0x90] sm:$0xf]
  %v109 = vld [vmem:[%s1 + $0x94] sm:$0xf]
  %v110 = vld [vmem:[%s1 + $0x98] sm:$0xf]
  %v111 = vld [vmem:[%s1 + $0x9c] sm:$0xf]
  %v112 = vld [vmem:[%s1 + $0xa0] sm:$0xf]
  %v113 = vld [vmem:[%s1 + $0xa4] sm:$0xf]
  %v114 = vld [vmem:[%s1 + $0xa8] sm:$0xf]
  %v115 = vld [vmem:[%s1 + $0xac] sm:$0xf]
  %v116 = vld [vmem:[%s1 + $0xb0] sm:$0xf]
  %v117 = vld [vmem:[%s1 + $0xb4] sm:$0xf]
  %v118 = vld [vmem:[%s1 + $0xb8] sm:$0xf]
  %v119 = vld [vmem:[%s1 + $0xbc] sm:$0xf]
  %v120 = vld [vmem:[%s1 + $0xc0] sm:$0xf]
  %v121 = vld [vmem:[%s1 + $0xc4] sm:$0xf]
  %v122 = vld [vmem:[%s1 + $0xc8] sm:$0xf]
  %v123 = vld [vmem:[%s1 + $0xcc] sm:$0xf]
  %v124 = vld [vmem:[%s1 + $0xd0] sm:$0xf]
  %v125 = vld [vmem:[%s1 + $0xd4] sm:$0xf]
  %v126 = vld [vmem:[%s1 + $0xd8] sm:$0xf]
  %v127 = vld [vmem:[%s1 + $0xdc] sm:$0xf]
  %v128 = vld [vmem:[%s1 + $0xe0] sm:$0xf]
  %v129 = vld [vmem:[%s1 + $0xe4] sm:$0xf]
  %v130 = vld [vmem:[%s1 + $0xe8] sm:$0xf]
  %v131 = vld [vmem:[%s1 + $0xec] sm:$0xf]
  %v132 = vld [vmem:[%s1 + $0xf0] sm:$0xf]
  %v133 = vld [vmem:[%s1 + $0xf4] sm:$0xf]
  %v134 = vld [vmem:[%s1 + $0xf8] sm:$0xf]
  %v135 = vld [vmem:[%s1 + $0xfc] sm:$0xf]
  %v136 = vld [vmem:[%s1 + $0x100] sm:$0xf]
  %v137 = vld [vmem:[%s1 + $0x104] sm:$0xf]
  %v138 = vld [vmem:[%s1 + $0x108] sm:$0xf]
  %v139 = vld [vmem:[%s1 + $0x10c] sm:$0xf]
  %v140 = vld [vmem:[%s1 + $0x110] sm:$0xf]
  %v141 = vld [vmem:[%s1 + $0x114] sm:$0xf]
  %v142 = vld [vmem:[%s1 + $0x118] sm:$0xf]
  %v143 = vld [vmem:[%s1 + $0x11c] sm:$0xf]
  %v144 = vld [vmem:[%s1 + $0x120] sm:$0xf]
  %v145 = vld [vmem:[%s1 + $0x124] sm:$0xf]
  %v146 = vld [vmem:[%s1 + $0x128] sm:$0xf]
  %v147 = vld [vmem:[%s1 + $0x12c] sm:$0xf]
  %v148 = vld [vmem:[%s1 + $0x130] sm:$0xf]
  %v149 = vld [vmem:[%s1 + $0x134] sm:$0xf]
  %v150 = vld [vmem:[%s1 + $0x138] sm:$0xf]
  %v151 = vld [vmem:[%s1 + $0x13c] sm:$0xf]
  %v152 = vld [vmem:[%s2] sm:$0x1]
  %v154 = vlaneseq
  %v155 = vshrl.u32 %v154, 7
  %v156 = vsub.s32 0, %v155
  %v157 = vrot.slane %v152, %v156
  %v207 = vunpack.c.l.b16 %v24
  %v208 = vunpack.c.h.b16 %v24
  %v209 = vunpack.c.l.b16 %v25
  %v210 = vunpack.c.h.b16 %v25
  %v211 = vunpack.c.l.b16 %v26
  %v212 = vunpack.c.l.b16 %v27
  %v213 = vunpack.c.h.b16 %v27
  %v214 = vunpack.c.l.b16 %v28
  %v215 = vunpack.c.h.b16 %v28
  %v216 = vunpack.c.l.b16 %v29
  %v217 = vunpack.c.l.b16 %v30
  %v218 = vunpack.c.h.b16 %v30
  %v219 = vunpack.c.l.b16 %v31
  %v220 = vunpack.c.h.b16 %v31
  %v221 = vunpack.c.l.b16 %v32
  %v222 = vunpack.c.l.b16 %v33
  %v223 = vunpack.c.h.b16 %v33
  %v224 = vunpack.c.l.b16 %v34
  %v225 = vunpack.c.h.b16 %v34
  %v226 = vunpack.c.l.b16 %v35
  %v227 = vunpack.c.l.b16 %v36
  %v228 = vunpack.c.h.b16 %v36
  %v229 = vunpack.c.l.b16 %v37
  %v230 = vunpack.c.h.b16 %v37
  %v231 = vunpack.c.l.b16 %v38
  %v232 = vunpack.c.l.b16 %v39
  %v233 = vunpack.c.h.b16 %v39
  %v234 = vunpack.c.l.b16 %v40
  %v235 = vunpack.c.h.b16 %v40
  %v236 = vunpack.c.l.b16 %v41
  %v237 = vunpack.c.l.b16 %v42
  %v238 = vunpack.c.h.b16 %v42
  %v239 = vunpack.c.l.b16 %v43
  %v240 = vunpack.c.h.b16 %v43
  %v241 = vunpack.c.l.b16 %v44
  %v242 = vunpack.c.l.b16 %v45
  %v243 = vunpack.c.h.b16 %v45
  %v244 = vunpack.c.l.b16 %v46
  %v245 = vunpack.c.h.b16 %v46
  %v246 = vunpack.c.l.b16 %v47
  %v247 = vunpack.c.l.b16 %v48
  %v248 = vunpack.c.h.b16 %v48
  %v249 = vunpack.c.l.b16 %v49
  %v250 = vunpack.c.h.b16 %v49
  %v251 = vunpack.c.l.b16 %v50
  %v252 = vunpack.c.l.b16 %v51
  %v253 = vunpack.c.h.b16 %v51
  %v254 = vunpack.c.l.b16 %v52
  %v255 = vunpack.c.h.b16 %v52
  %v256 = vunpack.c.l.b16 %v53
  %v257 = vunpack.c.l.b16 %v54
  %v258 = vunpack.c.h.b16 %v54
  %v259 = vunpack.c.l.b16 %v55
  %v260 = vunpack.c.h.b16 %v55
  %v261 = vunpack.c.l.b16 %v56
  %v262 = vunpack.c.l.b16 %v57
  %v263 = vunpack.c.h.b16 %v57
  %v264 = vunpack.c.l.b16 %v58
  %v265 = vunpack.c.h.b16 %v58
  %v266 = vunpack.c.l.b16 %v59
  %v267 = vunpack.c.l.b16 %v60
  %v268 = vunpack.c.h.b16 %v60
  %v269 = vunpack.c.l.b16 %v61
  %v270 = vunpack.c.h.b16 %v61
  %v271 = vunpack.c.l.b16 %v62
  %v272 = vunpack.c.l.b16 %v63
  %v273 = vunpack.c.h.b16 %v63
  %v274 = vunpack.c.l.b16 %v64
  %v275 = vunpack.c.h.b16 %v64
  %v276 = vunpack.c.l.b16 %v65
  %v277 = vunpack.c.l.b16 %v66
  %v278 = vunpack.c.h.b16 %v66
  %v279 = vunpack.c.l.b16 %v67
  %v280 = vunpack.c.h.b16 %v67
  %v281 = vunpack.c.l.b16 %v68
  %v282 = vunpack.c.l.b16 %v69
  %v283 = vunpack.c.h.b16 %v69
  %v284 = vunpack.c.l.b16 %v70
  %v285 = vunpack.c.h.b16 %v70
  %v286 = vunpack.c.l.b16 %v71
  %v287 = vpack.c.b16 %v212, %v207
  %v288 = vpack.c.b16 %v213, %v208
  %v289 = vpack.c.b16 %v214, %v209
  %v290 = vpack.c.b16 %v215, %v210
  %v291 = vpack.c.b16 %v216, %v211
  %v292 = vpack.c.b16 %v222, %v217
  %v293 = vpack.c.b16 %v223, %v218
  %v294 = vpack.c.b16 %v224, %v219
  %v295 = vpack.c.b16 %v225, %v220
  %v296 = vpack.c.b16 %v226, %v221
  %v297 = vpack.c.b16 %v232, %v227
  %v298 = vpack.c.b16 %v233, %v228
  %v299 = vpack.c.b16 %v234, %v229
  %v300 = vpack.c.b16 %v235, %v230
  %v301 = vpack.c.b16 %v236, %v231
  %v302 = vpack.c.b16 %v242, %v237
  %v303 = vpack.c.b16 %v243, %v238
  %v304 = vpack.c.b16 %v244, %v239
  %v305 = vpack.c.b16 %v245, %v240
  %v306 = vpack.c.b16 %v246, %v241
  %v307 = vpack.c.b16 %v252, %v247
  %v308 = vpack.c.b16 %v253, %v248
  %v309 = vpack.c.b16 %v254, %v249
  %v310 = vpack.c.b16 %v255, %v250
  %v311 = vpack.c.b16 %v256, %v251
  %v312 = vpack.c.b16 %v262, %v257
  %v313 = vpack.c.b16 %v263, %v258
  %v314 = vpack.c.b16 %v264, %v259
  %v315 = vpack.c.b16 %v265, %v260
  %v316 = vpack.c.b16 %v266, %v261
  %v317 = vpack.c.b16 %v272, %v267
  %v318 = vpack.c.b16 %v273, %v268
  %v319 = vpack.c.b16 %v274, %v269
  %v320 = vpack.c.b16 %v275, %v270
  %v321 = vpack.c.b16 %v276, %v271
  %v322 = vpack.c.b16 %v282, %v277
  %v323 = vpack.c.b16 %v283, %v278
  %v324 = vpack.c.b16 %v284, %v279
  %v325 = vpack.c.b16 %v285, %v280
  %v326 = vpack.c.b16 %v286, %v281
  %v447 = vunpack.c.l.b16 %v72
  %v448 = vunpack.c.l.b16 %v73
  %v449 = vunpack.c.l.b16 %v74
  %v450 = vunpack.c.l.b16 %v75
  %v451 = vunpack.c.l.b16 %v76
  %v452 = vunpack.c.l.b16 %v77
  %v453 = vunpack.c.l.b16 %v78
  %v454 = vunpack.c.l.b16 %v79
  %v455 = vunpack.c.l.b16 %v80
  %v456 = vunpack.c.l.b16 %v81
  %v457 = vunpack.c.l.b16 %v82
  %v458 = vunpack.c.l.b16 %v83
  %v459 = vunpack.c.l.b16 %v84
  %v460 = vunpack.c.l.b16 %v85
  %v461 = vunpack.c.l.b16 %v86
  %v462 = vunpack.c.l.b16 %v87
  %v463 = vunpack.c.l.b16 %v88
  %v464 = vunpack.c.l.b16 %v89
  %v465 = vunpack.c.l.b16 %v90
  %v466 = vunpack.c.l.b16 %v91
  %v467 = vunpack.c.l.b16 %v92
  %v468 = vunpack.c.l.b16 %v93
  %v469 = vunpack.c.l.b16 %v94
  %v470 = vunpack.c.l.b16 %v95
  %v471 = vunpack.c.l.b16 %v96
  %v472 = vunpack.c.l.b16 %v97
  %v473 = vunpack.c.l.b16 %v98
  %v474 = vunpack.c.l.b16 %v99
  %v475 = vunpack.c.l.b16 %v100
  %v476 = vunpack.c.l.b16 %v101
  %v477 = vunpack.c.l.b16 %v102
  %v478 = vunpack.c.l.b16 %v103
  %v479 = vunpack.c.l.b16 %v104
  %v480 = vunpack.c.l.b16 %v105
  %v481 = vunpack.c.l.b16 %v106
  %v482 = vunpack.c.l.b16 %v107
  %v483 = vunpack.c.l.b16 %v108
  %v484 = vunpack.c.l.b16 %v109
  %v485 = vunpack.c.l.b16 %v110
  %v486 = vunpack.c.l.b16 %v111
  %v487 = vunpack.c.l.b16 %v112
  %v488 = vunpack.c.l.b16 %v113
  %v489 = vunpack.c.l.b16 %v114
  %v490 = vunpack.c.l.b16 %v115
  %v491 = vunpack.c.l.b16 %v116
  %v492 = vunpack.c.l.b16 %v117
  %v493 = vunpack.c.l.b16 %v118
  %v494 = vunpack.c.l.b16 %v119
  %v495 = vunpack.c.l.b16 %v120
  %v496 = vunpack.c.l.b16 %v121
  %v497 = vunpack.c.l.b16 %v122
  %v498 = vunpack.c.l.b16 %v123
  %v499 = vunpack.c.l.b16 %v124
  %v500 = vunpack.c.l.b16 %v125
  %v501 = vunpack.c.l.b16 %v126
  %v502 = vunpack.c.l.b16 %v127
  %v503 = vunpack.c.l.b16 %v128
  %v504 = vunpack.c.l.b16 %v129
  %v505 = vunpack.c.l.b16 %v130
  %v506 = vunpack.c.l.b16 %v131
  %v507 = vunpack.c.l.b16 %v132
  %v508 = vunpack.c.l.b16 %v133
  %v509 = vunpack.c.l.b16 %v134
  %v510 = vunpack.c.l.b16 %v135
  %v511 = vunpack.c.l.b16 %v136
  %v512 = vunpack.c.l.b16 %v137
  %v513 = vunpack.c.l.b16 %v138
  %v514 = vunpack.c.l.b16 %v139
  %v515 = vunpack.c.l.b16 %v140
  %v516 = vunpack.c.l.b16 %v141
  %v517 = vunpack.c.l.b16 %v142
  %v518 = vunpack.c.l.b16 %v143
  %v519 = vunpack.c.l.b16 %v144
  %v520 = vunpack.c.l.b16 %v145
  %v521 = vunpack.c.l.b16 %v146
  %v522 = vunpack.c.l.b16 %v147
  %v523 = vunpack.c.l.b16 %v148
  %v524 = vunpack.c.l.b16 %v149
  %v525 = vunpack.c.l.b16 %v150
  %v526 = vunpack.c.l.b16 %v151
  %v527 = vpack.c.b16 %v448, %v447
  %v528 = vpack.c.b16 %v450, %v449
  %v529 = vpack.c.b16 %v452, %v451
  %v530 = vpack.c.b16 %v454, %v453
  %v531 = vpack.c.b16 %v456, %v455
  %v532 = vpack.c.b16 %v458, %v457
  %v533 = vpack.c.b16 %v460, %v459
  %v534 = vpack.c.b16 %v462, %v461
  %v535 = vpack.c.b16 %v464, %v463
  %v536 = vpack.c.b16 %v466, %v465
  %v537 = vpack.c.b16 %v468, %v467
  %v538 = vpack.c.b16 %v470, %v469
  %v539 = vpack.c.b16 %v472, %v471
  %v540 = vpack.c.b16 %v474, %v473
  %v541 = vpack.c.b16 %v476, %v475
  %v542 = vpack.c.b16 %v478, %v477
  %v543 = vpack.c.b16 %v480, %v479
  %v544 = vpack.c.b16 %v482, %v481
  %v545 = vpack.c.b16 %v484, %v483
  %v546 = vpack.c.b16 %v486, %v485
  %v547 = vpack.c.b16 %v488, %v487
  %v548 = vpack.c.b16 %v490, %v489
  %v549 = vpack.c.b16 %v492, %v491
  %v550 = vpack.c.b16 %v494, %v493
  %v551 = vpack.c.b16 %v496, %v495
  %v552 = vpack.c.b16 %v498, %v497
  %v553 = vpack.c.b16 %v500, %v499
  %v554 = vpack.c.b16 %v502, %v501
  %v555 = vpack.c.b16 %v504, %v503
  %v556 = vpack.c.b16 %v506, %v505
  %v557 = vpack.c.b16 %v508, %v507
  %v558 = vpack.c.b16 %v510, %v509
  %v559 = vpack.c.b16 %v512, %v511
  %v560 = vpack.c.b16 %v514, %v513
  %v561 = vpack.c.b16 %v516, %v515
  %v562 = vpack.c.b16 %v518, %v517
  %v563 = vpack.c.b16 %v520, %v519
  %v564 = vpack.c.b16 %v522, %v521
  %v565 = vpack.c.b16 %v524, %v523
  %v566 = vpack.c.b16 %v526, %v525
  %607 = vmatprep.subr.bf16.mxu0 0
  %608 = vmatpush1.bf16.msra.mxu0 %v534
  %609 = vmatprep.subr.bf16.mxu0 0
  %610 = vmatpush1.bf16.msra.mxu0 %v533
  %611 = vmatprep.subr.bf16.mxu0 0
  %612 = vmatpush1.bf16.msra.mxu0 %v532
  %613 = vmatprep.subr.bf16.mxu0 0
  %614 = vmatpush1.bf16.msra.mxu0 %v531
  %615 = vmatprep.subr.bf16.mxu0 0
  %616 = vmatpush1.bf16.msra.mxu0 %v530
  %617 = vmatprep.subr.bf16.mxu0 0
  %618 = vmatpush1.bf16.msra.mxu0 %v529
  %619 = vmatprep.subr.bf16.mxu0 0
  %620 = vmatpush1.bf16.msra.mxu0 %v528
  %621 = vmatprep.subr.bf16.mxu0 0
  %622 = vmatpush1.bf16.msra.mxu0 %v527
  %623 = vmatprep.subr.bf16.mxu0 0
  %624 = vmatpush2.bf16.msra.mxu0 %v542
  %625 = vmatprep.subr.bf16.mxu0 0
  %626 = vmatpush2.bf16.msra.mxu0 %v541
  %627 = vmatprep.subr.bf16.mxu0 0
  %628 = vmatpush2.bf16.msra.mxu0 %v540
  %629 = vmatprep.subr.bf16.mxu0 0
  %630 = vmatpush2.bf16.msra.mxu0 %v539
  %631 = vmatprep.subr.bf16.mxu0 0
  %632 = vmatpush2.bf16.msra.mxu0 %v538
  %633 = vmatprep.subr.bf16.mxu0 0
  %634 = vmatpush2.bf16.msra.mxu0 %v537
  %635 = vmatprep.subr.bf16.mxu0 0
  %636 = vmatpush2.bf16.msra.mxu0 %v536
  %637 = vmatprep.subr.bf16.mxu0 0
  %638 = vmatpush2.bf16.msra.mxu0 %v535
  %639 = vmatprep.mubr.bf16.mxu0 %v288
  %640 = vmatmul.mubr.bf16.gmra.mxu0 %v287
  %v641 = vpop.f32.mrf.mxu0
  %v642 = vadd.f32 %v157, %v641
  %v643 = vpop.f32.mrf.mxu0
  %v644 = vpop.f32.mrf.mxu0
  %v645 = vadd.f32 %v157, %v644
  %v646 = vpop.f32.mrf.mxu0
  %647 = vmatprep.mubr.bf16.mxu0 %v293
  %648 = vmatmul.mubr.bf16.gmra.mxu0 %v292
  %v649 = vpop.f32.mrf.mxu0
  %v650 = vadd.f32 %v157, %v649
  %v651 = vpop.f32.mrf.mxu0
  %v652 = vpop.f32.mrf.mxu0
  %v653 = vadd.f32 %v157, %v652
  %v654 = vpop.f32.mrf.mxu0
  %655 = vmatprep.mubr.bf16.mxu0 %v298
  %656 = vmatmul.mubr.bf16.gmra.mxu0 %v297
  %v657 = vpop.f32.mrf.mxu0
  %v658 = vadd.f32 %v157, %v657
  %v659 = vpop.f32.mrf.mxu0
  %v660 = vpop.f32.mrf.mxu0
  %v661 = vadd.f32 %v157, %v660
  %v662 = vpop.f32.mrf.mxu0
  %663 = vmatprep.mubr.bf16.mxu0 %v303
  %664 = vmatmul.mubr.bf16.gmra.mxu0 %v302
  %v665 = vpop.f32.mrf.mxu0
  %v666 = vadd.f32 %v157, %v665
  %v667 = vpop.f32.mrf.mxu0
  %v668 = vpop.f32.mrf.mxu0
  %v669 = vadd.f32 %v157, %v668
  %v670 = vpop.f32.mrf.mxu0
  %671 = vmatprep.mubr.bf16.mxu0 %v308
  %672 = vmatmul.mubr.bf16.gmra.mxu0 %v307
  %v673 = vpop.f32.mrf.mxu0
  %v674 = vadd.f32 %v157, %v673
  %v675 = vpop.f32.mrf.mxu0
  %v676 = vpop.f32.mrf.mxu0
  %v677 = vadd.f32 %v157, %v676
  %v678 = vpop.f32.mrf.mxu0
  %679 = vmatprep.mubr.bf16.mxu0 %v313
  %680 = vmatmul.mubr.bf16.gmra.mxu0 %v312
  %v681 = vpop.f32.mrf.mxu0
  %v682 = vadd.f32 %v157, %v681
  %v683 = vpop.f32.mrf.mxu0
  %v684 = vpop.f32.mrf.mxu0
  %v685 = vadd.f32 %v157, %v684
  %v686 = vpop.f32.mrf.mxu0
  %687 = vmatprep.mubr.bf16.mxu0 %v318
  %688 = vmatmul.mubr.bf16.gmra.mxu0 %v317
  %v689 = vpop.f32.mrf.mxu0
  %v690 = vadd.f32 %v157, %v689
  %v691 = vpop.f32.mrf.mxu0
  %v692 = vpop.f32.mrf.mxu0
  %v693 = vadd.f32 %v157, %v692
  %v694 = vpop.f32.mrf.mxu0
  %695 = vmatprep.mubr.bf16.mxu0 %v323
  %696 = vmatmul.mubr.bf16.gmra.mxu0 %v322
  %v697 = vpop.f32.mrf.mxu0
  %v698 = vadd.f32 %v157, %v697
  %v699 = vpop.f32.mrf.mxu0
  %v700 = vpop.f32.mrf.mxu0
  %v701 = vadd.f32 %v157, %v700
  %v702 = vpop.f32.mrf.mxu0
  %703 = vdwg.mxu0
  %704 = vmatprep.subr.bf16.mxu0 0
  %705 = vmatpush1.bf16.msra.mxu0 %v550
  %706 = vmatprep.subr.bf16.mxu0 0
  %707 = vmatpush1.bf16.msra.mxu0 %v549
  %708 = vmatprep.subr.bf16.mxu0 0
  %709 = vmatpush1.bf16.msra.mxu0 %v548
  %710 = vmatprep.subr.bf16.mxu0 0
  %711 = vmatpush1.bf16.msra.mxu0 %v547
  %712 = vmatprep.subr.bf16.mxu0 0
  %713 = vmatpush1.bf16.msra.mxu0 %v546
  %714 = vmatprep.subr.bf16.mxu0 0
  %715 = vmatpush1.bf16.msra.mxu0 %v545
  %716 = vmatprep.subr.bf16.mxu0 0
  %717 = vmatpush1.bf16.msra.mxu0 %v544
  %718 = vmatprep.subr.bf16.mxu0 0
  %719 = vmatpush1.bf16.msra.mxu0 %v543
  %720 = vmatprep.subr.bf16.mxu0 0
  %721 = vmatpush2.bf16.msra.mxu0 %v558
  %722 = vmatprep.subr.bf16.mxu0 0
  %723 = vmatpush2.bf16.msra.mxu0 %v557
  %724 = vmatprep.subr.bf16.mxu0 0
  %725 = vmatpush2.bf16.msra.mxu0 %v556
  %726 = vmatprep.subr.bf16.mxu0 0
  %727 = vmatpush2.bf16.msra.mxu0 %v555
  %728 = vmatprep.subr.bf16.mxu0 0
  %729 = vmatpush2.bf16.msra.mxu0 %v554
  %730 = vmatprep.subr.bf16.mxu0 0
  %731 = vmatpush2.bf16.msra.mxu0 %v553
  %732 = vmatprep.subr.bf16.mxu0 0
  %733 = vmatpush2.bf16.msra.mxu0 %v552
  %734 = vmatprep.subr.bf16.mxu0 0
  %735 = vmatpush2.bf16.msra.mxu0 %v551
  %736 = vmatprep.mubr.bf16.mxu0 %v290
  %737 = vmatmul.mubr.bf16.gmra.mxu0 %v289
  %v738 = vpop.f32.mrf.mxu0
  %v739 = vadd.f32 %v642, %v738
  %v740 = vpop.f32.mrf.mxu0
  %v741 = vpop.f32.mrf.mxu0
  %v742 = vadd.f32 %v645, %v741
  %v743 = vpop.f32.mrf.mxu0
  %744 = vmatprep.mubr.bf16.mxu0 %v295
  %745 = vmatmul.mubr.bf16.gmra.mxu0 %v294
  %v746 = vpop.f32.mrf.mxu0
  %v747 = vadd.f32 %v650, %v746
  %v748 = vpop.f32.mrf.mxu0
  %v749 = vpop.f32.mrf.mxu0
  %v750 = vadd.f32 %v653, %v749
  %v751 = vpop.f32.mrf.mxu0
  %752 = vmatprep.mubr.bf16.mxu0 %v300
  %753 = vmatmul.mubr.bf16.gmra.mxu0 %v299
  %v754 = vpop.f32.mrf.mxu0
  %v755 = vadd.f32 %v658, %v754
  %v756 = vpop.f32.mrf.mxu0
  %v757 = vpop.f32.mrf.mxu0
  %v758 = vadd.f32 %v661, %v757
  %v759 = vpop.f32.mrf.mxu0
  %760 = vmatprep.mubr.bf16.mxu0 %v305
  %761 = vmatmul.mubr.bf16.gmra.mxu0 %v304
  %v762 = vpop.f32.mrf.mxu0
  %v763 = vadd.f32 %v666, %v762
  %v764 = vpop.f32.mrf.mxu0
  %v765 = vpop.f32.mrf.mxu0
  %v766 = vadd.f32 %v669, %v765
  %v767 = vpop.f32.mrf.mxu0
  %768 = vmatprep.mubr.bf16.mxu0 %v310
  %769 = vmatmul.mubr.bf16.gmra.mxu0 %v309
  %v770 = vpop.f32.mrf.mxu0
  %v771 = vadd.f32 %v674, %v770
  %v772 = vpop.f32.mrf.mxu0
  %v773 = vpop.f32.mrf.mxu0
  %v774 = vadd.f32 %v677, %v773
  %v775 = vpop.f32.mrf.mxu0
  %776 = vmatprep.mubr.bf16.mxu0 %v315
  %777 = vmatmul.mubr.bf16.gmra.mxu0 %v314
  %v778 = vpop.f32.mrf.mxu0
  %v779 = vadd.f32 %v682, %v778
  %v780 = vpop.f32.mrf.mxu0
  %v781 = vpop.f32.mrf.mxu0
  %v782 = vadd.f32 %v685, %v781
  %v783 = vpop.f32.mrf.mxu0
  %784 = vmatprep.mubr.bf16.mxu0 %v320
  %785 = vmatmul.mubr.bf16.gmra.mxu0 %v319
  %v786 = vpop.f32.mrf.mxu0
  %v787 = vadd.f32 %v690, %v786
  %v788 = vpop.f32.mrf.mxu0
  %v789 = vpop.f32.mrf.mxu0
  %v790 = vadd.f32 %v693, %v789
  %v791 = vpop.f32.mrf.mxu0
  %792 = vmatprep.mubr.bf16.mxu0 %v325
  %793 = vmatmul.mubr.bf16.gmra.mxu0 %v324
  %v794 = vpop.f32.mrf.mxu0
  %v795 = vadd.f32 %v698, %v794
  %v796 = vpop.f32.mrf.mxu0
  %v797 = vpop.f32.mrf.mxu0
  %v798 = vadd.f32 %v701, %v797
  %v799 = vpop.f32.mrf.mxu0
  %800 = vdwg.mxu0
  %801 = vmatprep.subr.bf16.mxu0 0
  %802 = vmatpush1.bf16.msra.mxu0 %v566
  %803 = vmatprep.subr.bf16.mxu0 0
  %804 = vmatpush1.bf16.msra.mxu0 %v565
  %805 = vmatprep.subr.bf16.mxu0 0
  %806 = vmatpush1.bf16.msra.mxu0 %v564
  %807 = vmatprep.subr.bf16.mxu0 0
  %808 = vmatpush1.bf16.msra.mxu0 %v563
  %809 = vmatprep.subr.bf16.mxu0 0
  %810 = vmatpush1.bf16.msra.mxu0 %v562
  %811 = vmatprep.subr.bf16.mxu0 0
  %812 = vmatpush1.bf16.msra.mxu0 %v561
  %813 = vmatprep.subr.bf16.mxu0 0
  %814 = vmatpush1.bf16.msra.mxu0 %v560
  %815 = vmatprep.subr.bf16.mxu0 0
  %816 = vmatpush1.bf16.msra.mxu0 %v559
  %817 = vmatprep.subr.bf16.mxu0 0
  %818 = vmatpush2.bf16.msra.mxu0 0
  %819 = vmatprep.subr.bf16.mxu0 0
  %820 = vmatpush2.bf16.msra.mxu0 0
  %821 = vmatprep.subr.bf16.mxu0 0
  %822 = vmatpush2.bf16.msra.mxu0 0
  %823 = vmatprep.subr.bf16.mxu0 0
  %824 = vmatpush2.bf16.msra.mxu0 0
  %825 = vmatprep.subr.bf16.mxu0 0
  %826 = vmatpush2.bf16.msra.mxu0 0
  %827 = vmatprep.subr.bf16.mxu0 0
  %828 = vmatpush2.bf16.msra.mxu0 0
  %829 = vmatprep.subr.bf16.mxu0 0
  %830 = vmatpush2.bf16.msra.mxu0 0
  %831 = vmatprep.subr.bf16.mxu0 0
  %832 = vmatpush2.bf16.msra.mxu0 0
  %833 = vmatprep.mubr.bf16.mxu0 0
  %834 = vmatmul.mubr.bf16.gmra.mxu0 %v291
  %v835 = vpop.f32.mrf.mxu0
  %v836 = vadd.f32 %v739, %v835
  %v837 = vpop.f32.mrf.mxu0
  %v838 = vpop.f32.mrf.mxu0
  %v839 = vadd.f32 %v742, %v838
  %v840 = vpop.f32.mrf.mxu0
  %841 = vmatprep.mubr.bf16.mxu0 0
  %842 = vmatmul.mubr.bf16.gmra.mxu0 %v296
  %v843 = vpop.f32.mrf.mxu0
  %v844 = vadd.f32 %v747, %v843
  %v845 = vpop.f32.mrf.mxu0
  %v846 = vpop.f32.mrf.mxu0
  %v847 = vadd.f32 %v750, %v846
  %v848 = vpop.f32.mrf.mxu0
  %849 = vmatprep.mubr.bf16.mxu0 0
  %850 = vmatmul.mubr.bf16.gmra.mxu0 %v301
  %v851 = vpop.f32.mrf.mxu0
  %v852 = vadd.f32 %v755, %v851
  %v853 = vpop.f32.mrf.mxu0
  %v854 = vpop.f32.mrf.mxu0
  %v855 = vadd.f32 %v758, %v854
  %v856 = vpop.f32.mrf.mxu0
  %857 = vmatprep.mubr.bf16.mxu0 0
  %858 = vmatmul.mubr.bf16.gmra.mxu0 %v306
  %v859 = vpop.f32.mrf.mxu0
  %v860 = vadd.f32 %v763, %v859
  %v861 = vpop.f32.mrf.mxu0
  %v862 = vpop.f32.mrf.mxu0
  %v863 = vadd.f32 %v766, %v862
  %v864 = vpop.f32.mrf.mxu0
  %865 = vmatprep.mubr.bf16.mxu0 0
  %866 = vmatmul.mubr.bf16.gmra.mxu0 %v311
  %v867 = vpop.f32.mrf.mxu0
  %v868 = vadd.f32 %v771, %v867
  %v869 = vpop.f32.mrf.mxu0
  %v870 = vpop.f32.mrf.mxu0
  %v871 = vadd.f32 %v774, %v870
  %v872 = vpop.f32.mrf.mxu0
  %873 = vmatprep.mubr.bf16.mxu0 0
  %874 = vmatmul.mubr.bf16.gmra.mxu0 %v316
  %v875 = vpop.f32.mrf.mxu0
  %v876 = vadd.f32 %v779, %v875
  %v877 = vpop.f32.mrf.mxu0
  %v878 = vpop.f32.mrf.mxu0
  %v879 = vadd.f32 %v782, %v878
  %v880 = vpop.f32.mrf.mxu0
  %881 = vmatprep.mubr.bf16.mxu0 0
  %882 = vmatmul.mubr.bf16.gmra.mxu0 %v321
  %v883 = vpop.f32.mrf.mxu0
  %v884 = vadd.f32 %v787, %v883
  %v885 = vpop.f32.mrf.mxu0
  %v886 = vpop.f32.mrf.mxu0
  %v887 = vadd.f32 %v790, %v886
  %v888 = vpop.f32.mrf.mxu0
  %889 = vmatprep.mubr.bf16.mxu0 0
  %890 = vmatmul.mubr.bf16.gmra.mxu0 %v326
  %v891 = vpop.f32.mrf.mxu0
  %v892 = vadd.f32 %v795, %v891
  %v893 = vpop.f32.mrf.mxu0
  %v894 = vpop.f32.mrf.mxu0
  %v895 = vadd.f32 %v798, %v894
  %v896 = vpop.f32.mrf.mxu0
  %897 = vdwg.mxu0
  %v898 = vmax.f32 %v836, 0.0
  %v899 = vmax.f32 %v839, 0.0
  %v900 = vmax.f32 %v844, 0.0
  %v901 = vmax.f32 %v847, 0.0
  %v902 = vmax.f32 %v852, 0.0
  %v903 = vmax.f32 %v855, 0.0
  %v904 = vmax.f32 %v860, 0.0
  %v905 = vmax.f32 %v863, 0.0
  %v906 = vmax.f32 %v868, 0.0
  %v907 = vmax.f32 %v871, 0.0
  %v908 = vmax.f32 %v876, 0.0
  %v909 = vmax.f32 %v879, 0.0
  %v910 = vmax.f32 %v884, 0.0
  %v911 = vmax.f32 %v887, 0.0
  %v912 = vmax.f32 %v892, 0.0
  %v913 = vmax.f32 %v895, 0.0
  %v914 = vld [vmem:[%s3] sm:$0xff]
  %v915 = vld [vmem:[%s3 + $0x8] sm:$0xff]
  %v916 = vmul.f32 %v898, %v914
  %v917 = vmul.f32 %v899, %v915
  %v918 = vmul.f32 %v900, %v914
  %v919 = vmul.f32 %v901, %v915
  %v920 = vmul.f32 %v902, %v914
  %v921 = vmul.f32 %v903, %v915
  %v922 = vmul.f32 %v904, %v914
  %v923 = vmul.f32 %v905, %v915
  %v924 = vmul.f32 %v906, %v914
  %v925 = vmul.f32 %v907, %v915
  %v926 = vmul.f32 %v908, %v914
  %v927 = vmul.f32 %v909, %v915
  %v928 = vmul.f32 %v910, %v914
  %v929 = vmul.f32 %v911, %v915
  %v930 = vmul.f32 %v912, %v914
  %v931 = vmul.f32 %v913, %v915
  %v932 = vmax.f32 %v916, %v917
  %v933 = vrot.slane %v932, 4
  %v934 = vmax.f32 %v932, %v933
  %v935 = vrot.slane %v934, 2
  %v936 = vmax.f32 %v934, %v935
  %v937 = vrot.slane %v936, 1
  %v938 = vmax.f32 %v936, %v937
  %v939 = vmax.f32 %v918, %v919
  %v940 = vrot.slane %v939, 4
  %v941 = vmax.f32 %v939, %v940
  %v942 = vrot.slane %v941, 2
  %v943 = vmax.f32 %v941, %v942
  %v944 = vrot.slane %v943, 1
  %v945 = vmax.f32 %v943, %v944
  %v946 = vmax.f32 %v920, %v921
  %v947 = vrot.slane %v946, 4
  %v948 = vmax.f32 %v946, %v947
  %v949 = vrot.slane %v948, 2
  %v950 = vmax.f32 %v948, %v949
  %v951 = vrot.slane %v950, 1
  %v952 = vmax.f32 %v950, %v951
  %v953 = vmax.f32 %v922, %v923
  %v954 = vrot.slane %v953, 4
  %v955 = vmax.f32 %v953, %v954
  %v956 = vrot.slane %v955, 2
  %v957 = vmax.f32 %v955, %v956
  %v958 = vrot.slane %v957, 1
  %v959 = vmax.f32 %v957, %v958
  %v960 = vmax.f32 %v924, %v925
  %v961 = vrot.slane %v960, 4
  %v962 = vmax.f32 %v960, %v961
  %v963 = vrot.slane %v962, 2
  %v964 = vmax.f32 %v962, %v963
  %v965 = vrot.slane %v964, 1
  %v966 = vmax.f32 %v964, %v965
  %v967 = vmax.f32 %v926, %v927
  %v968 = vrot.slane %v967, 4
  %v969 = vmax.f32 %v967, %v968
  %v970 = vrot.slane %v969, 2
  %v971 = vmax.f32 %v969, %v970
  %v972 = vrot.slane %v971, 1
  %v973 = vmax.f32 %v971, %v972
  %v974 = vmax.f32 %v928, %v929
  %v975 = vrot.slane %v974, 4
  %v976 = vmax.f32 %v974, %v975
  %v977 = vrot.slane %v976, 2
  %v978 = vmax.f32 %v976, %v977
  %v979 = vrot.slane %v978, 1
  %v980 = vmax.f32 %v978, %v979
  %v981 = vmax.f32 %v930, %v931
  %v982 = vrot.slane %v981, 4
  %v983 = vmax.f32 %v981, %v982
  %v984 = vrot.slane %v983, 2
  %v985 = vmax.f32 %v983, %v984
  %v986 = vrot.slane %v985, 1
  %v987 = vmax.f32 %v985, %v986
  %v988 = vld [vmem:[%s4] sm:$0xff]
  %v989 = vld [vmem:[%s4 + $0x8] sm:$0xff]
  %v990 = vld [vmem:[%s4 + $0x10] sm:$0xff]
  %v991 = vld [vmem:[%s4 + $0x18] sm:$0xff]
  %v992 = vld [vmem:[%s4 + $0x20] sm:$0xff]
  %v993 = vld [vmem:[%s4 + $0x28] sm:$0xff]
  %v994 = vld [vmem:[%s4 + $0x30] sm:$0xff]
  %v995 = vld [vmem:[%s4 + $0x38] sm:$0xff]
  %v996 = vld [vmem:[%s4 + $0x40] sm:$0xff]
  %v997 = vld [vmem:[%s4 + $0x48] sm:$0xff]
  %v998 = vld [vmem:[%s4 + $0x50] sm:$0xff]
  %v999 = vld [vmem:[%s4 + $0x58] sm:$0xff]
  %v1000 = vld [vmem:[%s4 + $0x60] sm:$0xff]
  %v1001 = vld [vmem:[%s4 + $0x68] sm:$0xff]
  %v1002 = vld [vmem:[%s4 + $0x70] sm:$0xff]
  %v1003 = vld [vmem:[%s4 + $0x78] sm:$0xff]
  %v1004 = vld [vmem:[%s5] sm:$0x1]
  %v1006 = vlaneseq
  %v1007 = vshrl.u32 %v1006, 7
  %v1008 = vsub.s32 0, %v1007
  %v1009 = vrot.slane %v1004, %v1008
  %vm1019 = vcmask 1041409
  %v1020 = vsel %vm1019, %v945, %v938
  %vm1021 = vcmask 1042434
  %v1022 = vsel %vm1021, %v952, %v1020
  %vm1023 = vcmask 1043459
  %v1024 = vsel %vm1023, %v959, %v1022
  %vm1025 = vcmask 1044484
  %v1026 = vsel %vm1025, %v966, %v1024
  %vm1027 = vcmask 1045509
  %v1028 = vsel %vm1027, %v973, %v1026
  %vm1029 = vcmask 1046534
  %v1030 = vsel %vm1029, %v980, %v1028
  %vm1031 = vcmask 1047559
  %v1032 = vsel %vm1031, %v987, %v1030
  %1034 = vmatprep.subr.mxu0 0.0
  %1035 = vmatpush1.msra.mxu0 %v1003
  %1036 = vmatprep.subr.mxu0 0.0
  %1037 = vmatpush1.msra.mxu0 %v1002
  %1038 = vmatprep.subr.mxu0 0.0
  %1039 = vmatpush1.msra.mxu0 %v1001
  %1040 = vmatprep.subr.mxu0 0.0
  %1041 = vmatpush1.msra.mxu0 %v1000
  %1042 = vmatprep.subr.mxu0 0.0
  %1043 = vmatpush1.msra.mxu0 %v999
  %1044 = vmatprep.subr.mxu0 0.0
  %1045 = vmatpush1.msra.mxu0 %v998
  %1046 = vmatprep.subr.mxu0 0.0
  %1047 = vmatpush1.msra.mxu0 %v997
  %1048 = vmatprep.subr.mxu0 0.0
  %1049 = vmatpush1.msra.mxu0 %v996
  %1050 = vmatprep.subr.mxu0 0.0
  %1051 = vmatpush1.msra.mxu0 %v995
  %1052 = vmatprep.subr.mxu0 0.0
  %1053 = vmatpush1.msra.mxu0 %v994
  %1054 = vmatprep.subr.mxu0 0.0
  %1055 = vmatpush1.msra.mxu0 %v993
  %1056 = vmatprep.subr.mxu0 0.0
  %1057 = vmatpush1.msra.mxu0 %v992
  %1058 = vmatprep.subr.mxu0 0.0
  %1059 = vmatpush1.msra.mxu0 %v991
  %1060 = vmatprep.subr.mxu0 0.0
  %1061 = vmatpush1.msra.mxu0 %v990
  %1062 = vmatprep.subr.mxu0 0.0
  %1063 = vmatpush1.msra.mxu0 %v989
  %1064 = vmatprep.subr.mxu0 0.0
  %1065 = vmatpush1.msra.mxu0 %v988
  %1066 = vmatprep.subr.mxu0 0.0
  %1067 = vmatpush2.msra.mxu0 0.0
  %1068 = vmatprep.subr.mxu0 0.0
  %1069 = vmatpush2.msra.mxu0 0.0
  %1070 = vmatprep.subr.mxu0 0.0
  %1071 = vmatpush2.msra.mxu0 0.0
  %1072 = vmatprep.subr.mxu0 0.0
  %1073 = vmatpush2.msra.mxu0 0.0
  %1074 = vmatprep.subr.mxu0 0.0
  %1075 = vmatpush2.msra.mxu0 0.0
  %1076 = vmatprep.subr.mxu0 0.0
  %1077 = vmatpush2.msra.mxu0 0.0
  %1078 = vmatprep.subr.mxu0 0.0
  %1079 = vmatpush2.msra.mxu0 0.0
  %1080 = vmatprep.subr.mxu0 0.0
  %1081 = vmatpush2.msra.mxu0 0.0
  %1082 = vmatprep.subr.mxu0 0.0
  %1083 = vmatpush2.msra.mxu0 0.0
  %1084 = vmatprep.subr.mxu0 0.0
  %1085 = vmatpush2.msra.mxu0 0.0
  %1086 = vmatprep.subr.mxu0 0.0
  %1087 = vmatpush2.msra.mxu0 0.0
  %1088 = vmatprep.subr.mxu0 0.0
  %1089 = vmatpush2.msra.mxu0 0.0
  %1090 = vmatprep.subr.mxu0 0.0
  %1091 = vmatpush2.msra.mxu0 0.0
  %1092 = vmatprep.subr.mxu0 0.0
  %1093 = vmatpush2.msra.mxu0 0.0
  %1094 = vmatprep.subr.mxu0 0.0
  %1095 = vmatpush2.msra.mxu0 0.0
  %1096 = vmatprep.subr.mxu0 0.0
  %1097 = vmatpush2.msra.mxu0 0.0
  %1098 = vmatprep.mubr.f32.mxu0 0.0
  %1099 = vmatmul.mubr.f32.gmra.mxu0 %v1032
  %v1100 = vpop.f32.mrf.mxu0
  %v1101 = vadd.f32 %v1009, %v1100
  %v1102 = vpop.f32.mrf.mxu0
  %1103 = vdwg.mxu0
  %vm1104 = vcmask 31744
  %v1105 = vsel %vm1104, %v1101, -inf
  %1106 = vmax.xlane.f32.xlu0 %v1105
  %v1107 = vpop.xlane.xlu0 %1106
  %v1108 = vsub.f32 %v1101, %v1107
  %v1109 = vmul.f32 %v1108, 1.442695
  %v1110 = vpow.pop %v1109
  %v1111 = vsel %vm1104, %v1110, 0.0
  %1112 = vadd.xlane.f32.xlu0 %v1111
  %v1113 = vpop.xlane.xlu0 %1112
  %v1114 = vrcp.pop %v1113
  %v1115 = vmul.f32 %v1110, %v1114
  %v1116 = vmax.f32 %v1115, 1e-06
  %v1117 = vmin.f32 %v1116, 0.999999
  %1118 = vst.msk [vmem:[%s6] sm:$0xff] %vm1104, %v1117
  // Predicated region
  $region26: #{cnn_text_forward.1} parent=0 // pred_check
    _
  $region27: #{cnn_text_forward.1} parent=0 // pred_check_branch
    %1120 = sbr.rel (0) target = $region29
  $region28: #{cnn_text_forward.1} parent=0 // pred_region
    _
  $region29: #{cnn_text_forward.1} parent=0 // pred_fallthru
    _
  // Predicated region
  $region30: #{cnn_text_forward.1} parent=0 // pred_check
    _
  $region31: #{cnn_text_forward.1} parent=0 // pred_check_branch
    %1122 = sbr.rel (0) target = $region33
  $region32: #{cnn_text_forward.1} parent=0 // pred_region
    _
  $region33: #{cnn_text_forward.1} parent=0 // pred_fallthru
    _

</llo_original>
